<compile_context>
chip_gen: v6e
topology: v6e:2x2x1
jax: 0.10.0
libtpu: 0.0.40
codegen_flags: <defaults>
</compile_context>

<pallas_src>
import functools

import jax
import jax.numpy as jnp
from jax.experimental import pallas as pl
from jax.experimental.pallas import tpu as pltpu

LEAKY_SLOPE = 0.2  # matches nn.LeakyReLU(0.2)


def _round_up(v, m):
    return (v + m - 1) // m * m


def _leaky_relu(v, slope=LEAKY_SLOPE):
    return jnp.where(v > 0, v, slope * v)


def encoder_kernel(x_ref, w1_ref, w2_ref, wh_ref, b1_ref, b2_ref, bh_ref, out_ref):
    """One batch tile of the fused encoder forward.

    x_ref  : (TILE_B, IN_P)   compute dtype (bf16 or f32), zero-padded lanes
    w1_ref : (IN_P,  HID_P)   compute dtype
    w2_ref : (HID_P, HID_P)   compute dtype
    wh_ref : (HID_P, LAT2_P)  compute dtype  (fused [mean | log_var] head)
    b*_ref : (1, HID_P) / (1, LAT2_P) f32
    out_ref: (TILE_B, LAT2_P) f32, lanes = [mean | log_var | zero padding]
    """
    cdt = w1_ref.dtype

    h = jnp.dot(x_ref[...], w1_ref[...], preferred_element_type=jnp.float32)
    h = _leaky_relu(h + b1_ref[...])

    h = jnp.dot(h.astype(cdt), w2_ref[...], preferred_element_type=jnp.float32)
    h = _leaky_relu(h + b2_ref[...])

    out_ref[...] = (
        jnp.dot(h.astype(cdt), wh_ref[...], preferred_element_type=jnp.float32)
        + bh_ref[...]
    )


def init_encoder_params(key, input_dim, hidden_dim, latent_dim):
    """PyTorch nn.Linear layout: weight (out_features, in_features), bias (out,)."""

    def linear(k, fan_in, fan_out):
        kw, kb = jax.random.split(k)
        bound = 1.0 / jnp.sqrt(jnp.float32(fan_in))
        w = jax.random.uniform(kw, (fan_out, fan_in), jnp.float32, -bound, bound)
        b = jax.random.uniform(kb, (fan_out,), jnp.float32, -bound, bound)
        return w, b

    k1, k2, k3, k4 = jax.random.split(key, 4)
    p = {}
    p["input1_w"], p["input1_b"] = linear(k1, input_dim, hidden_dim)
    p["input2_w"], p["input2_b"] = linear(k2, hidden_dim, hidden_dim)
    p["mean_w"], p["mean_b"] = linear(k3, hidden_dim, latent_dim)
    p["var_w"], p["var_b"] = linear(k4, hidden_dim, latent_dim)
    return p


def pack_encoder_params(params, *, compute_dtype=jnp.bfloat16):
    """Transpose to (in, out), fuse the mean|log_var head, pad each layer to its own
    lane-aligned shape, and cast matmul operands to `compute_dtype` (biases stay f32)."""
    hidden_dim, input_dim = params["input1_w"].shape
    latent_dim = params["mean_w"].shape[0]

    in_p = _round_up(input_dim, 128)
    hid_p = _round_up(hidden_dim, 128)
    lat2_p = _round_up(2 * latent_dim, 128)

    def pad_w(w_in_out, in_pad, out_pad):
        return (
            jnp.zeros((in_pad, out_pad), jnp.float32)
            .at[: w_in_out.shape[0], : w_in_out.shape[1]]
            .set(w_in_out)
            .astype(compute_dtype)
        )

    def pad_b(b, out_pad):
        return jnp.zeros((1, out_pad), jnp.float32).at[0, : b.shape[0]].set(b)

    wh = jnp.concatenate([params["mean_w"].T, params["var_w"].T], axis=1)   # (hid, 2*lat)
    bh = jnp.concatenate([params["mean_b"], params["var_b"]], axis=0)       # (2*lat,)

    return dict(
        w1=pad_w(params["input1_w"].T, in_p, hid_p),
        w2=pad_w(params["input2_w"].T, hid_p, hid_p),
        wh=pad_w(wh, hid_p, lat2_p),
        b1=pad_b(params["input1_b"], hid_p),
        b2=pad_b(params["input2_b"], hid_p),
        bh=pad_b(bh, lat2_p),
    )


def _batch_tile_cap():
    try:
        kind = jax.devices()[0].device_kind.lower()
        if "v5 lite" in kind or "v5e" in kind or "v5litepod" in kind:
            return 256  # v5e: no bf16 VPU, keep vreg pressure / f32 intermediates smaller
    except Exception:
        pass
    return 512


def _choose_batch_tile(batch, cap):
    """Sublane-aligned batch tile; >=2 grid steps when possible (v7x megacore sharding)
    and minimal last-tile padding."""
    b8 = _round_up(max(batch, 1), 8)
    if b8 <= 8:
        return b8, b8
    n_tiles = max(2, -(-b8 // cap))
    tile = _round_up(-(-b8 // n_tiles), 8)
    return tile, tile * n_tiles


@functools.partial(jax.jit, static_argnames=("latent_dim",))
def encoder_forward(x, packed, *, latent_dim):
    """Returns (mean, log_var), each (B, latent_dim) float32."""
    w1, w2, wh = packed["w1"], packed["w2"], packed["wh"]
    b1, b2, bh = packed["b1"], packed["b2"], packed["bh"]

    batch, input_dim = x.shape
    in_p, hid_p = w1.shape
    lat2_p = wh.shape[1]
    cdt = w1.dtype

    tile_b, b_pad = _choose_batch_tile(batch, _batch_tile_cap())
    grid = (b_pad // tile_b,)

    # Pad batch rows + input lanes (only to round_up(input_dim, 128)) and cast once.
    if (b_pad, in_p) == (batch, input_dim) and x.dtype == cdt:
        x_p = x
    else:
        x_p = jnp.zeros((b_pad, in_p), cdt).at[:batch, :input_dim].set(x.astype(cdt))

    resident = pl.Buffered(1)  # constant index_map -> fetched once, single buffer

    w_itemsize = w1.dtype.itemsize
    w_bytes = (w1.size + w2.size + wh.size) * w_itemsize
    b_bytes = (b1.size + b2.size + bh.size) * 4
    x_tile_bytes = tile_b * in_p * w_itemsize
    o_tile_bytes = tile_b * lat2_p * 4
    h_bytes = tile_b * hid_p * 4
    # weights (single-buffered) + double-buffered x/out streams + f32 intermediates,
    # with 2x slack.  Floor 32 MiB, cap 64 MiB (v7x physical per-TC).
    vmem_limit = int(
        min(
            64 * 1024 * 1024,
            max(
                32 * 1024 * 1024,
                2 * (w_bytes + b_bytes + 2 * x_tile_bytes + 2 * o_tile_bytes + 2 * h_bytes),
            ),
        )
    )

    cost = pl.CostEstimate(
        flops=int(2 * b_pad * (in_p * hid_p + hid_p * hid_p + hid_p * lat2_p)),
        transcendentals=0,
        bytes_accessed=int(x_p.size * w_itemsize + w_bytes + b_bytes + b_pad * lat2_p * 4),
    )

    out = pl.pallas_call(
        encoder_kernel,
        out_shape=jax.ShapeDtypeStruct((b_pad, lat2_p), jnp.float32),
        grid=grid,
        in_specs=[
            pl.BlockSpec((tile_b, in_p), lambda i: (i, 0)),                    # x: streamed
            pl.BlockSpec((in_p, hid_p), lambda i: (0, 0), pipeline_mode=resident),
            pl.BlockSpec((hid_p, hid_p), lambda i: (0, 0), pipeline_mode=resident),
            pl.BlockSpec((hid_p, lat2_p), lambda i: (0, 0), pipeline_mode=resident),
            pl.BlockSpec((1, hid_p), lambda i: (0, 0), pipeline_mode=resident),
            pl.BlockSpec((1, hid_p), lambda i: (0, 0), pipeline_mode=resident),
            pl.BlockSpec((1, lat2_p), lambda i: (0, 0), pipeline_mode=resident),
        ],
        out_specs=pl.BlockSpec((tile_b, lat2_p), lambda i: (i, 0)),
        compiler_params=pltpu.CompilerParams(
            dimension_semantics=("parallel",),  # batch shards across TCs on v7x
            vmem_limit_bytes=vmem_limit,
        ),
        cost_estimate=cost,
    )(x_p, w1, w2, wh, b1, b2, bh)

    mean = out[:batch, :latent_dim]
    log_var = out[:batch, latent_dim : 2 * latent_dim]
    return mean, log_var


def encoder_reference(x, params):
    """Pure-JAX reference matching the PyTorch module."""
    h = _leaky_relu(x @ params["input1_w"].T + params["input1_b"])
    h = _leaky_relu(h @ params["input2_w"].T + params["input2_b"])
    mean = h @ params["mean_w"].T + params["mean_b"]
    log_var = h @ params["var_w"].T + params["var_b"]
    return mean, log_var


if __name__ == "__main__":
    # Small shapes consistent with the module: batch=8, input=64, hidden=32, latent=16.
    B, INPUT_DIM, HIDDEN_DIM, LATENT_DIM = 8, 64, 32, 16

    root = jax.random.PRNGKey(0)
    k_x, k_params = jax.random.split(root)

    x = jax.random.uniform(k_x, (B, INPUT_DIM), jnp.float32)
    params = init_encoder_params(k_params, INPUT_DIM, HIDDEN_DIM, LATENT_DIM)
    ref_mean, ref_log_var = encoder_reference(x, params)

    # f32 operands: tight check of packing / kernel semantics.
    packed_f32 = pack_encoder_params(params, compute_dtype=jnp.float32)
    mean32, log_var32 = encoder_forward(x, packed_f32, latent_dim=LATENT_DIM)
    jax.block_until_ready((mean32, log_var32))
    assert mean32.shape == (B, LATENT_DIM) and log_var32.shape == (B, LATENT_DIM)
    assert bool(jnp.allclose(mean32, ref_mean, atol=1e-4, rtol=1e-4))
    assert bool(jnp.allclose(log_var32, ref_log_var, atol=1e-4, rtol=1e-4))

    # bf16 matmul operands (MXU-native on v6e/v7x): looser tolerance.
    packed_bf16 = pack_encoder_params(params, compute_dtype=jnp.bfloat16)
    mean16, log_var16 = encoder_forward(x, packed_bf16, latent_dim=LATENT_DIM)
    jax.block_until_ready((mean16, log_var16))
    assert bool(jnp.all(jnp.isfinite(mean16))) and bool(jnp.all(jnp.isfinite(log_var16)))
    assert bool(jnp.allclose(mean16, ref_mean, atol=5e-2, rtol=5e-2))
    assert bool(jnp.allclose(log_var16, ref_log_var, atol=5e-2, rtol=5e-2))

    print("KERNEL_OK")
</pallas_src>

<mosaic_0001>
module attributes {stable_mosaic.version = 11 : i64} {
  func.func @encoder_kernel(%arg0: i32, %arg1: memref<8x128xf32, #tpu.memory_space<vmem>>, %arg2: memref<128x128xf32, #tpu.memory_space<vmem>>, %arg3: memref<128x128xf32, #tpu.memory_space<vmem>>, %arg4: memref<128x128xf32, #tpu.memory_space<vmem>>, %arg5: memref<1x128xf32, #tpu.memory_space<vmem>>, %arg6: memref<1x128xf32, #tpu.memory_space<vmem>>, %arg7: memref<1x128xf32, #tpu.memory_space<vmem>>, %arg8: memref<8x128xf32, #tpu.memory_space<vmem>>) attributes {dimension_semantics = [#tpu.dimension_semantics<parallel>], iteration_bounds = array<i64: 1>, scalar_prefetch = 0 : i64, scratch_operands = 0 : i64, tpu.core_type = #tpu.core_type<tc>, window_params = [{transform_indices = @transform_0, window_bounds = array<i64: 8, 128>}, {pipeline_mode = #tpu.pipeline_mode<synchronous>, transform_indices = @transform_1, window_bounds = array<i64: 128, 128>}, {pipeline_mode = #tpu.pipeline_mode<synchronous>, transform_indices = @transform_2, window_bounds = array<i64: 128, 128>}, {pipeline_mode = #tpu.pipeline_mode<synchronous>, transform_indices = @transform_3, window_bounds = array<i64: 128, 128>}, {pipeline_mode = #tpu.pipeline_mode<synchronous>, transform_indices = @transform_4, window_bounds = array<i64: 1, 128>}, {pipeline_mode = #tpu.pipeline_mode<synchronous>, transform_indices = @transform_5, window_bounds = array<i64: 1, 128>}, {pipeline_mode = #tpu.pipeline_mode<synchronous>, transform_indices = @transform_6, window_bounds = array<i64: 1, 128>}, {transform_indices = @transform_7, window_bounds = array<i64: 8, 128>}]} {
    %c0 = arith.constant 0 : index
    %c0_0 = arith.constant 0 : index
    %0 = vector.load %arg1[%c0, %c0_0] : memref<8x128xf32, #tpu.memory_space<vmem>>, vector<8x128xf32>
    %c0_1 = arith.constant 0 : index
    %c0_2 = arith.constant 0 : index
    %1 = vector.load %arg2[%c0_1, %c0_2] : memref<128x128xf32, #tpu.memory_space<vmem>>, vector<128x128xf32>
    %cst = arith.constant dense<0.000000e+00> : vector<8x128xf32>
    %2 = tpu.matmul %0, %1, %cst {dimension_numbers = #tpu.dot_dimension_numbers<[1], [0], [0], [1], [0, 0, 1, 1], [], []>} : vector<8x128xf32>, vector<128x128xf32>, vector<8x128xf32> -> vector<8x128xf32>
    %c0_3 = arith.constant 0 : index
    %c0_4 = arith.constant 0 : index
    %3 = vector.load %arg5[%c0_3, %c0_4] : memref<1x128xf32, #tpu.memory_space<vmem>>, vector<1x128xf32>
    %4 = vector.broadcast %3 : vector<1x128xf32> to vector<8x128xf32>
    %5 = arith.addf %2, %4 : vector<8x128xf32>
    %cst_5 = arith.constant 0.000000e+00 : f32
    %6 = vector.broadcast %cst_5 : f32 to vector<8x128xf32>
    %7 = arith.cmpf ogt, %5, %6 : vector<8x128xf32>
    %cst_6 = arith.constant 2.000000e-01 : f32
    %8 = vector.broadcast %cst_6 : f32 to vector<8x128xf32>
    %9 = arith.mulf %8, %5 : vector<8x128xf32>
    %10 = arith.select %7, %5, %9 : vector<8x128xi1>, vector<8x128xf32>
    %c0_7 = arith.constant 0 : index
    %c0_8 = arith.constant 0 : index
    %11 = vector.load %arg3[%c0_7, %c0_8] : memref<128x128xf32, #tpu.memory_space<vmem>>, vector<128x128xf32>
    %cst_9 = arith.constant dense<0.000000e+00> : vector<8x128xf32>
    %12 = tpu.matmul %10, %11, %cst_9 {dimension_numbers = #tpu.dot_dimension_numbers<[1], [0], [0], [1], [0, 0, 1, 1], [], []>} : vector<8x128xf32>, vector<128x128xf32>, vector<8x128xf32> -> vector<8x128xf32>
    %c0_10 = arith.constant 0 : index
    %c0_11 = arith.constant 0 : index
    %13 = vector.load %arg6[%c0_10, %c0_11] : memref<1x128xf32, #tpu.memory_space<vmem>>, vector<1x128xf32>
    %14 = vector.broadcast %13 : vector<1x128xf32> to vector<8x128xf32>
    %15 = arith.addf %12, %14 : vector<8x128xf32>
    %cst_12 = arith.constant 0.000000e+00 : f32
    %16 = vector.broadcast %cst_12 : f32 to vector<8x128xf32>
    %17 = arith.cmpf ogt, %15, %16 : vector<8x128xf32>
    %cst_13 = arith.constant 2.000000e-01 : f32
    %18 = vector.broadcast %cst_13 : f32 to vector<8x128xf32>
    %19 = arith.mulf %18, %15 : vector<8x128xf32>
    %20 = arith.select %17, %15, %19 : vector<8x128xi1>, vector<8x128xf32>
    %c0_14 = arith.constant 0 : index
    %c0_15 = arith.constant 0 : index
    %21 = vector.load %arg4[%c0_14, %c0_15] : memref<128x128xf32, #tpu.memory_space<vmem>>, vector<128x128xf32>
    %cst_16 = arith.constant dense<0.000000e+00> : vector<8x128xf32>
    %22 = tpu.matmul %20, %21, %cst_16 {dimension_numbers = #tpu.dot_dimension_numbers<[1], [0], [0], [1], [0, 0, 1, 1], [], []>} : vector<8x128xf32>, vector<128x128xf32>, vector<8x128xf32> -> vector<8x128xf32>
    %c0_17 = arith.constant 0 : index
    %c0_18 = arith.constant 0 : index
    %23 = vector.load %arg7[%c0_17, %c0_18] : memref<1x128xf32, #tpu.memory_space<vmem>>, vector<1x128xf32>
    %24 = vector.broadcast %23 : vector<1x128xf32> to vector<8x128xf32>
    %25 = arith.addf %22, %24 : vector<8x128xf32>
    %c0_19 = arith.constant 0 : index
    %c0_20 = arith.constant 0 : index
    %26 = vector.load %arg8[%c0_19, %c0_20] : memref<8x128xf32, #tpu.memory_space<vmem>>, vector<8x128xf32>
    tpu.vector_store %arg8[%c0_19, %c0_20], %25 {strides = array<i32>} : memref<8x128xf32, #tpu.memory_space<vmem>>, vector<8x128xf32>,
    return
  }
  func.func @transform_0(%arg0: i32) -> (i32, i32) {
    %c0_i32 = arith.constant 0 : i32
    %c0_i32_0 = arith.constant 0 : i32
    return %arg0, %c0_i32 : i32, i32
  }
  func.func @transform_1(%arg0: i32) -> (i32, i32) {
    %c0_i32 = arith.constant 0 : i32
    %c0_i32_0 = arith.constant 0 : i32
    %c0_i32_1 = arith.constant 0 : i32
    return %c0_i32, %c0_i32_0 : i32, i32
  }
  func.func @transform_2(%arg0: i32) -> (i32, i32) {
    %c0_i32 = arith.constant 0 : i32
    %c0_i32_0 = arith.constant 0 : i32
    %c0_i32_1 = arith.constant 0 : i32
    return %c0_i32, %c0_i32_0 : i32, i32
  }
  func.func @transform_3(%arg0: i32) -> (i32, i32) {
    %c0_i32 = arith.constant 0 : i32
    %c0_i32_0 = arith.constant 0 : i32
    %c0_i32_1 = arith.constant 0 : i32
    return %c0_i32, %c0_i32_0 : i32, i32
  }
  func.func @transform_4(%arg0: i32) -> (i32, i32) {
    %c0_i32 = arith.constant 0 : i32
    %c0_i32_0 = arith.constant 0 : i32
    %c0_i32_1 = arith.constant 0 : i32
    return %c0_i32, %c0_i32_0 : i32, i32
  }
  func.func @transform_5(%arg0: i32) -> (i32, i32) {
    %c0_i32 = arith.constant 0 : i32
    %c0_i32_0 = arith.constant 0 : i32
    %c0_i32_1 = arith.constant 0 : i32
    return %c0_i32, %c0_i32_0 : i32, i32
  }
  func.func @transform_6(%arg0: i32) -> (i32, i32) {
    %c0_i32 = arith.constant 0 : i32
    %c0_i32_0 = arith.constant 0 : i32
    %c0_i32_1 = arith.constant 0 : i32
    return %c0_i32, %c0_i32_0 : i32, i32
  }
  func.func @transform_7(%arg0: i32) -> (i32, i32) {
    %c0_i32 = arith.constant 0 : i32
    %c0_i32_0 = arith.constant 0 : i32
    return %arg0, %c0_i32 : i32, i32
  }
}

</mosaic_0001>

<llo_original>
// kernel: encoder_forward.1
$region0: #{encoder_forward.1}
  #allocation0 [shape = 'u32[]', space=smem, size = 0x4, offset = 0x4, fixed_abs, tag = 'smem constant byte address 0x4 - core index']
  #allocation1 [shape = 'u32[144,128]{1,0:T(1,128)}', space=vmem, size = 0x12000, scoped, tag = 'internal scratch']
  %s0 = inlined_call_operand.vmem [shape: f32[8,128], index: 0, kind: input, shape index: {}]
  %s1 = inlined_call_operand.hbm [shape: f32[128,128], index: 1, kind: input, shape index: {}]
  %s2 = inlined_call_operand.hbm [shape: f32[128,128], index: 2, kind: input, shape index: {}]
  %s3 = inlined_call_operand.hbm [shape: f32[128,128], index: 3, kind: input, shape index: {}]
  %s4 = inlined_call_operand.vmem [shape: f32[1,128], index: 4, kind: input, shape index: {}]
  %s5 = inlined_call_operand.vmem [shape: f32[1,128], index: 5, kind: input, shape index: {}]
  %s6 = inlined_call_operand.vmem [shape: f32[1,128], index: 6, kind: input, shape index: {}]
  %s7 = inlined_call_operand.vmem [shape: f32[8,128], index: 7, kind: output, shape index: {}]
  %s8 = sld [smem:[#allocation0]]
  $region50: #{encoder_forward.1} parent=0
    _
  %s10 = ssub.s32 1, %s8
  %s11 = scalar_select 0, %s10, %s8
  $region1: #{encoder_forward.1} parent=0
    #allocation2 [shape = 'u8[65536]{0}', space=vmem, size = 0x10000, scoped, tag = 'input window, operand 1, single buffered']
    #allocation3 [shape = 's32[1]{0}', space=sflag, size = 0x4, scoped, tag = 'scoped memory for encoder_forward.1']
    #allocation4 [shape = 'u8[65536]{0}', space=vmem, size = 0x10000, scoped, tag = 'input window, operand 2, single buffered']
    #allocation5 [shape = 's32[1]{0}', space=sflag, size = 0x4, scoped, tag = 'scoped memory for encoder_forward.1']
    #allocation6 [shape = 'u8[65536]{0}', space=vmem, size = 0x10000, scoped, tag = 'input window, operand 3, single buffered']
    %12 = vsyncpa [#allocation3], 0
    %13 = vsyncpa [#allocation5], 0
    // Predicated region
    $region2: #{encoder_forward.1} parent=1 // pred_check
      _
    $region3: #{encoder_forward.1} parent=1 // pred_check_branch
      %15 = sbr.rel (0) target = $region5
    $region4: #{encoder_forward.1} parent=1 // pred_region
      _
    $region5: #{encoder_forward.1} parent=1 // pred_fallthru
      _
    // Predicated region
    $region6: #{encoder_forward.1} parent=1 // pred_check
      _
    $region7: #{encoder_forward.1} parent=1 // pred_check_branch
      %17 = sbr.rel (0) target = $region9
    $region8: #{encoder_forward.1} parent=1 // pred_region
      %s19 = ssub.s32 2048, 2048
      %20 = vsyncadd [#allocation3], %s19
      %s21 = sshll.u32 [#allocation2], 4
      %s22 = int_to_ptr.vmem [resolvable:$true] %s21
      %27 = dma.hbm_to_vmem [thread:$0]  %s1, 2048, %s22, [#allocation3], 128, 128, 8
    $region9: #{encoder_forward.1} parent=1 // pred_fallthru
      _
    // Predicated region
    $region10: #{encoder_forward.1} parent=1 // pred_check
      _
    $region11: #{encoder_forward.1} parent=1 // pred_check_branch
      %29 = sbr.rel (0) target = $region13
    $region12: #{encoder_forward.1} parent=1 // pred_region
      %s31 = ssub.s32 2048, 2048
      %32 = vsyncadd [#allocation5], %s31
      %s33 = sshll.u32 [#allocation4], 4
      %s34 = int_to_ptr.vmem [resolvable:$true] %s33
      %39 = dma.hbm_to_vmem [thread:$0]  %s2, 2048, %s34, [#allocation5], 128, 128, 8
    $region13: #{encoder_forward.1} parent=1 // pred_fallthru
      _
    // Predicated region
    $region14: #{encoder_forward.1} parent=1 // pred_check
      _
    $region15: #{encoder_forward.1} parent=1 // pred_check_branch
      %41 = sbr.rel (0) target = $region17
    $region16: #{encoder_forward.1} parent=1 // pred_region
      %s43 = ssub.s32 2048, 2048
      %44 = vsyncadd [#allocation5], %s43
      %s45 = sshll.u32 [#allocation6], 4
      %s46 = int_to_ptr.vmem [resolvable:$true] %s45
      %51 = dma.hbm_to_vmem [thread:$0]  %s3, 2048, %s46, [#allocation5], 128, 128, 8
    $region17: #{encoder_forward.1} parent=1 // pred_fallthru
      _
    // Predicated region
    $region18: #{encoder_forward.1} parent=1 // pred_check
      _
    $region19: #{encoder_forward.1} parent=1 // pred_check_branch
      %53 = sbr.rel (0) target = $region21
    $region20: #{encoder_forward.1} parent=1 // pred_region
      _
    $region21: #{encoder_forward.1} parent=1 // pred_fallthru
      _
    // Predicated region
    $region22: #{encoder_forward.1} parent=1 // pred_check
      _
    $region23: #{encoder_forward.1} parent=1 // pred_check_branch
      %55 = sbr.rel (0) target = $region25
    $region24: #{encoder_forward.1} parent=1 // pred_region
      _
    $region25: #{encoder_forward.1} parent=1 // pred_fallthru
      _
    // Predicated region
    $region26: #{encoder_forward.1} parent=1 // pred_check
      _
    $region27: #{encoder_forward.1} parent=1 // pred_check_branch
      %57 = sbr.rel (0) target = $region29
    $region28: #{encoder_forward.1} parent=1 // pred_region
      _
    $region29: #{encoder_forward.1} parent=1 // pred_fallthru
      _
    // Predicated region
    $region30: #{encoder_forward.1} parent=1 // pred_check
      _
    $region31: #{encoder_forward.1} parent=1 // pred_check_branch
      %59 = sbr.rel (0) target = $region33
    $region32: #{encoder_forward.1} parent=1 // pred_region
      %60 = dma.done [#allocation3], 2048
    $region33: #{encoder_forward.1} parent=1 // pred_fallthru
      _
    // Predicated region
    $region34: #{encoder_forward.1} parent=1 // pred_check
      _
    $region35: #{encoder_forward.1} parent=1 // pred_check_branch
      %62 = sbr.rel (0) target = $region37
    $region36: #{encoder_forward.1} parent=1 // pred_region
      %63 = dma.done [#allocation5], 2048
    $region37: #{encoder_forward.1} parent=1 // pred_fallthru
      _
    // Predicated region
    $region38: #{encoder_forward.1} parent=1 // pred_check
      _
    $region39: #{encoder_forward.1} parent=1 // pred_check_branch
      %65 = sbr.rel (0) target = $region41
    $region40: #{encoder_forward.1} parent=1 // pred_region
      %66 = dma.done [#allocation5], 2048
    $region41: #{encoder_forward.1} parent=1 // pred_fallthru
      _
    %v67 = vld [vmem:[%s0] sm:$0xff]
    %v68 = vld [vmem:[#allocation2] sm:$0xff]
    %v69 = vld [vmem:[#allocation2 + $0x8] sm:$0xff]
    %v70 = vld [vmem:[#allocation2 + $0x10] sm:$0xff]
    %v71 = vld [vmem:[#allocation2 + $0x18] sm:$0xff]
    %v72 = vld [vmem:[#allocation2 + $0x20] sm:$0xff]
    %v73 = vld [vmem:[#allocation2 + $0x28] sm:$0xff]
    %v74 = vld [vmem:[#allocation2 + $0x30] sm:$0xff]
    %v75 = vld [vmem:[#allocation2 + $0x38] sm:$0xff]
    %v76 = vld [vmem:[#allocation2 + $0x40] sm:$0xff]
    %v77 = vld [vmem:[#allocation2 + $0x48] sm:$0xff]
    %v78 = vld [vmem:[#allocation2 + $0x50] sm:$0xff]
    %v79 = vld [vmem:[#allocation2 + $0x58] sm:$0xff]
    %v80 = vld [vmem:[#allocation2 + $0x60] sm:$0xff]
    %v81 = vld [vmem:[#allocation2 + $0x68] sm:$0xff]
    %v82 = vld [vmem:[#allocation2 + $0x70] sm:$0xff]
    %v83 = vld [vmem:[#allocation2 + $0x78] sm:$0xff]
    %v84 = vld [vmem:[%s4] sm:$0x1]
    %v86 = vlaneseq
    %v87 = vshrl.u32 %v86, 7
    %v88 = vsub.s32 0, %v87
    %v89 = vrot.slane %v84, %v88
    %91 = vmatprep.subr.mxu0 0.0
    %92 = vmatpush1.msra.mxu0 %v83
    %93 = vmatprep.subr.mxu0 0.0
    %94 = vmatpush1.msra.mxu0 %v82
    %95 = vmatprep.subr.mxu0 0.0
    %96 = vmatpush1.msra.mxu0 %v81
    %97 = vmatprep.subr.mxu0 0.0
    %98 = vmatpush1.msra.mxu0 %v80
    %99 = vmatprep.subr.mxu0 0.0
    %100 = vmatpush1.msra.mxu0 %v79
    %101 = vmatprep.subr.mxu0 0.0
    %102 = vmatpush1.msra.mxu0 %v78
    %103 = vmatprep.subr.mxu0 0.0
    %104 = vmatpush1.msra.mxu0 %v77
    %105 = vmatprep.subr.mxu0 0.0
    %106 = vmatpush1.msra.mxu0 %v76
    %107 = vmatprep.subr.mxu0 0.0
    %108 = vmatpush1.msra.mxu0 %v75
    %109 = vmatprep.subr.mxu0 0.0
    %110 = vmatpush1.msra.mxu0 %v74
    %111 = vmatprep.subr.mxu0 0.0
    %112 = vmatpush1.msra.mxu0 %v73
    %113 = vmatprep.subr.mxu0 0.0
    %114 = vmatpush1.msra.mxu0 %v72
    %115 = vmatprep.subr.mxu0 0.0
    %116 = vmatpush1.msra.mxu0 %v71
    %117 = vmatprep.subr.mxu0 0.0
    %118 = vmatpush1.msra.mxu0 %v70
    %119 = vmatprep.subr.mxu0 0.0
    %120 = vmatpush1.msra.mxu0 %v69
    %121 = vmatprep.subr.mxu0 0.0
    %122 = vmatpush1.msra.mxu0 %v68
    %123 = vmatprep.subr.mxu0 0.0
    %124 = vmatpush2.msra.mxu0 0.0
    %125 = vmatprep.subr.mxu0 0.0
    %126 = vmatpush2.msra.mxu0 0.0
    %127 = vmatprep.subr.mxu0 0.0
    %128 = vmatpush2.msra.mxu0 0.0
    %129 = vmatprep.subr.mxu0 0.0
    %130 = vmatpush2.msra.mxu0 0.0
    %131 = vmatprep.subr.mxu0 0.0
    %132 = vmatpush2.msra.mxu0 0.0
    %133 = vmatprep.subr.mxu0 0.0
    %134 = vmatpush2.msra.mxu0 0.0
    %135 = vmatprep.subr.mxu0 0.0
    %136 = vmatpush2.msra.mxu0 0.0
    %137 = vmatprep.subr.mxu0 0.0
    %138 = vmatpush2.msra.mxu0 0.0
    %139 = vmatprep.subr.mxu0 0.0
    %140 = vmatpush2.msra.mxu0 0.0
    %141 = vmatprep.subr.mxu0 0.0
    %142 = vmatpush2.msra.mxu0 0.0
    %143 = vmatprep.subr.mxu0 0.0
    %144 = vmatpush2.msra.mxu0 0.0
    %145 = vmatprep.subr.mxu0 0.0
    %146 = vmatpush2.msra.mxu0 0.0
    %147 = vmatprep.subr.mxu0 0.0
    %148 = vmatpush2.msra.mxu0 0.0
    %149 = vmatprep.subr.mxu0 0.0
    %150 = vmatpush2.msra.mxu0 0.0
    %151 = vmatprep.subr.mxu0 0.0
    %152 = vmatpush2.msra.mxu0 0.0
    %153 = vmatprep.subr.mxu0 0.0
    %154 = vmatpush2.msra.mxu0 0.0
    %155 = vmatprep.mubr.f32.mxu0 0.0
    %156 = vmatmul.mubr.f32.gmra.mxu0 %v67
    %v157 = vpop.f32.mrf.mxu0
    %v158 = vadd.f32 %v89, %v157
    %v159 = vpop.f32.mrf.mxu0
    %160 = vdwg.mxu0
    %vm161 = vcmp.gt.f32.partialorder %v158, 0.0
    %v162 = vmul.f32 %v158, 0.2
    %v163 = vsel %vm161, %v158, %v162
    %v164 = vld [vmem:[#allocation4] sm:$0xff]
    %v165 = vld [vmem:[#allocation4 + $0x8] sm:$0xff]
    %v166 = vld [vmem:[#allocation4 + $0x10] sm:$0xff]
    %v167 = vld [vmem:[#allocation4 + $0x18] sm:$0xff]
    %v168 = vld [vmem:[#allocation4 + $0x20] sm:$0xff]
    %v169 = vld [vmem:[#allocation4 + $0x28] sm:$0xff]
    %v170 = vld [vmem:[#allocation4 + $0x30] sm:$0xff]
    %v171 = vld [vmem:[#allocation4 + $0x38] sm:$0xff]
    %v172 = vld [vmem:[#allocation4 + $0x40] sm:$0xff]
    %v173 = vld [vmem:[#allocation4 + $0x48] sm:$0xff]
    %v174 = vld [vmem:[#allocation4 + $0x50] sm:$0xff]
    %v175 = vld [vmem:[#allocation4 + $0x58] sm:$0xff]
    %v176 = vld [vmem:[#allocation4 + $0x60] sm:$0xff]
    %v177 = vld [vmem:[#allocation4 + $0x68] sm:$0xff]
    %v178 = vld [vmem:[#allocation4 + $0x70] sm:$0xff]
    %v179 = vld [vmem:[#allocation4 + $0x78] sm:$0xff]
    %v180 = vld [vmem:[%s5] sm:$0x1]
    %v182 = vlaneseq
    %v183 = vshrl.u32 %v182, 7
    %v184 = vsub.s32 0, %v183
    %v185 = vrot.slane %v180, %v184
    %187 = vmatprep.subr.mxu0 0.0
    %188 = vmatpush1.msra.mxu0 %v179
    %189 = vmatprep.subr.mxu0 0.0
    %190 = vmatpush1.msra.mxu0 %v178
    %191 = vmatprep.subr.mxu0 0.0
    %192 = vmatpush1.msra.mxu0 %v177
    %193 = vmatprep.subr.mxu0 0.0
    %194 = vmatpush1.msra.mxu0 %v176
    %195 = vmatprep.subr.mxu0 0.0
    %196 = vmatpush1.msra.mxu0 %v175
    %197 = vmatprep.subr.mxu0 0.0
    %198 = vmatpush1.msra.mxu0 %v174
    %199 = vmatprep.subr.mxu0 0.0
    %200 = vmatpush1.msra.mxu0 %v173
    %201 = vmatprep.subr.mxu0 0.0
    %202 = vmatpush1.msra.mxu0 %v172
    %203 = vmatprep.subr.mxu0 0.0
    %204 = vmatpush1.msra.mxu0 %v171
    %205 = vmatprep.subr.mxu0 0.0
    %206 = vmatpush1.msra.mxu0 %v170
    %207 = vmatprep.subr.mxu0 0.0
    %208 = vmatpush1.msra.mxu0 %v169
    %209 = vmatprep.subr.mxu0 0.0
    %210 = vmatpush1.msra.mxu0 %v168
    %211 = vmatprep.subr.mxu0 0.0
    %212 = vmatpush1.msra.mxu0 %v167
    %213 = vmatprep.subr.mxu0 0.0
    %214 = vmatpush1.msra.mxu0 %v166
    %215 = vmatprep.subr.mxu0 0.0
    %216 = vmatpush1.msra.mxu0 %v165
    %217 = vmatprep.subr.mxu0 0.0
    %218 = vmatpush1.msra.mxu0 %v164
    %219 = vmatprep.subr.mxu0 0.0
    %220 = vmatpush2.msra.mxu0 0.0
    %221 = vmatprep.subr.mxu0 0.0
    %222 = vmatpush2.msra.mxu0 0.0
    %223 = vmatprep.subr.mxu0 0.0
    %224 = vmatpush2.msra.mxu0 0.0
    %225 = vmatprep.subr.mxu0 0.0
    %226 = vmatpush2.msra.mxu0 0.0
    %227 = vmatprep.subr.mxu0 0.0
    %228 = vmatpush2.msra.mxu0 0.0
    %229 = vmatprep.subr.mxu0 0.0
    %230 = vmatpush2.msra.mxu0 0.0
    %231 = vmatprep.subr.mxu0 0.0
    %232 = vmatpush2.msra.mxu0 0.0
    %233 = vmatprep.subr.mxu0 0.0
    %234 = vmatpush2.msra.mxu0 0.0
    %235 = vmatprep.subr.mxu0 0.0
    %236 = vmatpush2.msra.mxu0 0.0
    %237 = vmatprep.subr.mxu0 0.0
    %238 = vmatpush2.msra.mxu0 0.0
    %239 = vmatprep.subr.mxu0 0.0
    %240 = vmatpush2.msra.mxu0 0.0
    %241 = vmatprep.subr.mxu0 0.0
    %242 = vmatpush2.msra.mxu0 0.0
    %243 = vmatprep.subr.mxu0 0.0
    %244 = vmatpush2.msra.mxu0 0.0
    %245 = vmatprep.subr.mxu0 0.0
    %246 = vmatpush2.msra.mxu0 0.0
    %247 = vmatprep.subr.mxu0 0.0
    %248 = vmatpush2.msra.mxu0 0.0
    %249 = vmatprep.subr.mxu0 0.0
    %250 = vmatpush2.msra.mxu0 0.0
    %251 = vmatprep.mubr.f32.mxu0 0.0
    %252 = vmatmul.mubr.f32.gmra.mxu0 %v163
    %v253 = vpop.f32.mrf.mxu0
    %v254 = vadd.f32 %v185, %v253
    %v255 = vpop.f32.mrf.mxu0
    %256 = vdwg.mxu0
    %vm257 = vcmp.gt.f32.partialorder %v254, 0.0
    %v258 = vmul.f32 %v254, 0.2
    %v259 = vsel %vm257, %v254, %v258
    %v260 = vld [vmem:[#allocation6] sm:$0xff]
    %v261 = vld [vmem:[#allocation6 + $0x8] sm:$0xff]
    %v262 = vld [vmem:[#allocation6 + $0x10] sm:$0xff]
    %v263 = vld [vmem:[#allocation6 + $0x18] sm:$0xff]
    %v264 = vld [vmem:[#allocation6 + $0x20] sm:$0xff]
    %v265 = vld [vmem:[#allocation6 + $0x28] sm:$0xff]
    %v266 = vld [vmem:[#allocation6 + $0x30] sm:$0xff]
    %v267 = vld [vmem:[#allocation6 + $0x38] sm:$0xff]
    %v268 = vld [vmem:[#allocation6 + $0x40] sm:$0xff]
    %v269 = vld [vmem:[#allocation6 + $0x48] sm:$0xff]
    %v270 = vld [vmem:[#allocation6 + $0x50] sm:$0xff]
    %v271 = vld [vmem:[#allocation6 + $0x58] sm:$0xff]
    %v272 = vld [vmem:[#allocation6 + $0x60] sm:$0xff]
    %v273 = vld [vmem:[#allocation6 + $0x68] sm:$0xff]
    %v274 = vld [vmem:[#allocation6 + $0x70] sm:$0xff]
    %v275 = vld [vmem:[#allocation6 + $0x78] sm:$0xff]
    %v276 = vld [vmem:[%s6] sm:$0x1]
    %v278 = vlaneseq
    %v279 = vshrl.u32 %v278, 7
    %v280 = vsub.s32 0, %v279
    %v281 = vrot.slane %v276, %v280
    %283 = vmatprep.subr.mxu0 0.0
    %284 = vmatpush1.msra.mxu0 %v275
    %285 = vmatprep.subr.mxu0 0.0
    %286 = vmatpush1.msra.mxu0 %v274
    %287 = vmatprep.subr.mxu0 0.0
    %288 = vmatpush1.msra.mxu0 %v273
    %289 = vmatprep.subr.mxu0 0.0
    %290 = vmatpush1.msra.mxu0 %v272
    %291 = vmatprep.subr.mxu0 0.0
    %292 = vmatpush1.msra.mxu0 %v271
    %293 = vmatprep.subr.mxu0 0.0
    %294 = vmatpush1.msra.mxu0 %v270
    %295 = vmatprep.subr.mxu0 0.0
    %296 = vmatpush1.msra.mxu0 %v269
    %297 = vmatprep.subr.mxu0 0.0
    %298 = vmatpush1.msra.mxu0 %v268
    %299 = vmatprep.subr.mxu0 0.0
    %300 = vmatpush1.msra.mxu0 %v267
    %301 = vmatprep.subr.mxu0 0.0
    %302 = vmatpush1.msra.mxu0 %v266
    %303 = vmatprep.subr.mxu0 0.0
    %304 = vmatpush1.msra.mxu0 %v265
    %305 = vmatprep.subr.mxu0 0.0
    %306 = vmatpush1.msra.mxu0 %v264
    %307 = vmatprep.subr.mxu0 0.0
    %308 = vmatpush1.msra.mxu0 %v263
    %309 = vmatprep.subr.mxu0 0.0
    %310 = vmatpush1.msra.mxu0 %v262
    %311 = vmatprep.subr.mxu0 0.0
    %312 = vmatpush1.msra.mxu0 %v261
    %313 = vmatprep.subr.mxu0 0.0
    %314 = vmatpush1.msra.mxu0 %v260
    %315 = vmatprep.subr.mxu0 0.0
    %316 = vmatpush2.msra.mxu0 0.0
    %317 = vmatprep.subr.mxu0 0.0
    %318 = vmatpush2.msra.mxu0 0.0
    %319 = vmatprep.subr.mxu0 0.0
    %320 = vmatpush2.msra.mxu0 0.0
    %321 = vmatprep.subr.mxu0 0.0
    %322 = vmatpush2.msra.mxu0 0.0
    %323 = vmatprep.subr.mxu0 0.0
    %324 = vmatpush2.msra.mxu0 0.0
    %325 = vmatprep.subr.mxu0 0.0
    %326 = vmatpush2.msra.mxu0 0.0
    %327 = vmatprep.subr.mxu0 0.0
    %328 = vmatpush2.msra.mxu0 0.0
    %329 = vmatprep.subr.mxu0 0.0
    %330 = vmatpush2.msra.mxu0 0.0
    %331 = vmatprep.subr.mxu0 0.0
    %332 = vmatpush2.msra.mxu0 0.0
    %333 = vmatprep.subr.mxu0 0.0
    %334 = vmatpush2.msra.mxu0 0.0
    %335 = vmatprep.subr.mxu0 0.0
    %336 = vmatpush2.msra.mxu0 0.0
    %337 = vmatprep.subr.mxu0 0.0
    %338 = vmatpush2.msra.mxu0 0.0
    %339 = vmatprep.subr.mxu0 0.0
    %340 = vmatpush2.msra.mxu0 0.0
    %341 = vmatprep.subr.mxu0 0.0
    %342 = vmatpush2.msra.mxu0 0.0
    %343 = vmatprep.subr.mxu0 0.0
    %344 = vmatpush2.msra.mxu0 0.0
    %345 = vmatprep.subr.mxu0 0.0
    %346 = vmatpush2.msra.mxu0 0.0
    %347 = vmatprep.mubr.f32.mxu0 0.0
    %348 = vmatmul.mubr.f32.gmra.mxu0 %v259
    %v349 = vpop.f32.mrf.mxu0
    %v350 = vadd.f32 %v281, %v349
    %v351 = vpop.f32.mrf.mxu0
    %352 = vdwg.mxu0
    %353 = vst [vmem:[%s7] sm:$0xff] %v350
    // Predicated region
    $region42: #{encoder_forward.1} parent=1 // pred_check
      _
    $region43: #{encoder_forward.1} parent=1 // pred_check_branch
      %355 = sbr.rel (0) target = $region45
    $region44: #{encoder_forward.1} parent=1 // pred_region
      _
    $region45: #{encoder_forward.1} parent=1 // pred_fallthru
      _
    // Predicated region
    $region46: #{encoder_forward.1} parent=1 // pred_check
      _
    $region47: #{encoder_forward.1} parent=1 // pred_check_branch
      %357 = sbr.rel (0) target = $region49
    $region48: #{encoder_forward.1} parent=1 // pred_region
      _
    $region49: #{encoder_forward.1} parent=1 // pred_fallthru
      _
    %358 = vsyncpa [#allocation3], 1
    %359 = vsyncpa [#allocation5], 1

</llo_original>
